<compile_context>
chip_gen: v7x
topology: tpu7x:2x2x1
jax: 0.10.0
libtpu: 0.0.40
codegen_flags: <defaults>
</compile_context>

<pallas_src>
import functools

import jax
import jax.numpy as jnp
from jax.experimental import pallas as pl
from jax.experimental.pallas import tpu as pltpu

HIDDEN = 256        # MLP hidden width (PPO default [256, 256])
OUT_LANES = 128     # lane-dense output slab width (needs 2*a_dim + 1 <= 128)


# ----------------------------------------------------------------------------
# Kernel: fused actor+critic forward for one batch tile.
# ----------------------------------------------------------------------------
def _network_kernel(
    s_ref,        # [TB, s_dim]            f32
    w1_ref,       # [s_dim, 2H]            bf16   (actor || critic, layer 1)
    w2_ref,       # [2, H, H]              bf16   (0 = actor l2, 1 = critic l2)
    w3_ref,       # [2H, 128]              bf16   (fused heads, actor head duplicated)
    bias_ref,     # [3, 2H]                f32    (row0=b1, row1=ba2|bc2, row2=b3-slab)
    out_ref,      # [TB, 128]              f32    prob | log_prob | value | 0
    *, a_dim,
):
    cdt = w1_ref.dtype                       # bf16 compute dtype for MXU operands
    x = s_ref[...].astype(cdt)

    b1 = bias_ref[0:1, :]                    # [1, 512]
    ba2 = bias_ref[1:2, :HIDDEN]             # [1, 256]
    bc2 = bias_ref[1:2, HIDDEN:]             # [1, 256]
    b3 = bias_ref[2:3, :OUT_LANES]           # [1, 128]

    # ---- layer 1: one fused matmul for both MLPs (N = 512) ----
    h1 = jnp.dot(x, w1_ref[...], preferred_element_type=jnp.float32) + b1
    h1 = jnp.maximum(h1, 0.0).astype(cdt)    # [TB, 512]

    # ---- layer 2: two independent 256x256 matmuls ----
    h2a = jnp.dot(h1[:, :HIDDEN], w2_ref[0],
                  preferred_element_type=jnp.float32) + ba2
    h2a = jnp.maximum(h2a, 0.0).astype(cdt)
    h2c = jnp.dot(h1[:, HIDDEN:], w2_ref[1],
                  preferred_element_type=jnp.float32) + bc2
    h2c = jnp.maximum(h2c, 0.0).astype(cdt)

    # ---- fused heads, split along K (no [TB, 512] concatenate) ----
    # Result lanes: [0:a_dim]=logits, [a_dim:2a_dim]=logits (dup), [2a_dim]=value, rest 0.
    y = (jnp.dot(h2a, w3_ref[:HIDDEN, :], preferred_element_type=jnp.float32)
         + jnp.dot(h2c, w3_ref[HIDDEN:, :], preferred_element_type=jnp.float32)
         + b3)                               # [TB, 128] f32

    # ---- softmax / log-softmax via full-vreg lane-masked selects ----
    lane = jax.lax.broadcasted_iota(jnp.int32, y.shape, 1)
    actor = lane < a_dim
    zm = jnp.where(actor, y, -jnp.inf)
    m = jnp.max(zm, axis=-1, keepdims=True)
    e = jnp.exp(zm - m)                      # exactly zero outside actor lanes
    denom = jnp.sum(e, axis=-1, keepdims=True)
    prob = e * pl.reciprocal(denom, approx=False)
    log_prob = (y - m) - jnp.log(denom)      # valid on the duplicated-logit lanes

    out_ref[...] = jnp.where(actor, prob,
                   jnp.where(lane < 2 * a_dim, log_prob,
                   jnp.where(lane == 2 * a_dim, y, 0.0)))


# ----------------------------------------------------------------------------
# One-time (cold path) packing of raw per-layer params into fused weights.
# ----------------------------------------------------------------------------
def pack_params(p, compute_dtype=jnp.bfloat16):
    a_dim = p["wa3"].shape[1]
    H = HIDDEN
    assert 2 * a_dim + 1 <= OUT_LANES, "a_dim too large for the 128-lane output slab"

    w1 = jnp.concatenate([p["wa1"], p["wc1"]], axis=1)            # [s_dim, 2H]
    w2 = jnp.stack([p["wa2"], p["wc2"]], axis=0)                  # [2, H, H]

    # Fused heads: actor head duplicated (prob lanes + log_prob lanes), critic at 2*a_dim.
    w3 = jnp.zeros((2 * H, OUT_LANES), jnp.float32)
    w3 = w3.at[:H, :a_dim].set(p["wa3"])
    w3 = w3.at[:H, a_dim:2 * a_dim].set(p["wa3"])
    w3 = w3.at[H:, 2 * a_dim].set(p["wc3"][:, 0])

    biases = jnp.zeros((3, 2 * H), jnp.float32)
    biases = biases.at[0, :].set(jnp.concatenate([p["ba1"], p["bc1"]], axis=1)[0])
    biases = biases.at[1, :H].set(p["ba2"][0])
    biases = biases.at[1, H:].set(p["bc2"][0])
    biases = biases.at[2, :a_dim].set(p["ba3"][0])
    biases = biases.at[2, a_dim:2 * a_dim].set(p["ba3"][0])
    biases = biases.at[2, 2 * a_dim].set(p["bc3"][0, 0])

    return dict(w1=w1.astype(compute_dtype),
                w2=w2.astype(compute_dtype),
                w3=w3.astype(compute_dtype),
                biases=biases)                 # biases stay f32 (added post-accumulation)


# ----------------------------------------------------------------------------
# Batch-tile selection: minimize padding, keep grid >= 2 for megacore when the
# batch is big enough, cap at 512 (safe under the v5e 16 MiB scoped default).
# ----------------------------------------------------------------------------
def _choose_batch_tile(b_pad):
    if b_pad <= 128:
        return b_pad
    half = min(512, (-(-(-(-b_pad // 2)) // 8)) * 8)  # ceil(b_pad/2) rounded to 8, capped
    best_tb, best_key = None, None
    for tb in sorted({128, 256, 512, half}):
        padded = -(-b_pad // tb) * tb
        if padded // tb < 2:                  # keep >= 2 tiles (v7x: both TensorCores)
            continue
        key = (padded, -tb)                   # least padding, then biggest tile
        if best_key is None or key < best_key:
            best_tb, best_key = tb, key
    return best_tb if best_tb is not None else 128


# ----------------------------------------------------------------------------
# Wrapper: batch-tiled pallas_call; weights are resident across the grid.
# ----------------------------------------------------------------------------
def network_forward(state, packed, a_dim):
    B, s_dim = state.shape

    B_pad = max(8, -(-B // 8) * 8)
    TB = _choose_batch_tile(B_pad)
    B_pad = -(-B_pad // TB) * TB
    if B_pad != B:
        state = jnp.pad(state, ((0, B_pad - B), (0, 0)))

    flops = 2 * B_pad * (s_dim * 2 * HIDDEN
                         + 2 * HIDDEN * HIDDEN
                         + 2 * HIDDEN * OUT_LANES)
    bytes_w = 2 * (s_dim * 2 * HIDDEN + 2 * HIDDEN * HIDDEN
                   + 2 * HIDDEN * OUT_LANES) + 4 * 3 * 2 * HIDDEN
    bytes_io = 4 * (B_pad * s_dim + B_pad * OUT_LANES)

    out = pl.pallas_call(
        functools.partial(_network_kernel, a_dim=a_dim),
        out_shape=jax.ShapeDtypeStruct((B_pad, OUT_LANES), jnp.float32),
        grid=(B_pad // TB,),
        in_specs=[
            pl.BlockSpec((TB, s_dim), lambda i: (i, 0)),                 # state tile
            pl.BlockSpec((s_dim, 2 * HIDDEN), lambda i: (0, 0)),         # w1 (resident)
            pl.BlockSpec((2, HIDDEN, HIDDEN), lambda i: (0, 0, 0)),      # w2 stacked
            pl.BlockSpec((2 * HIDDEN, OUT_LANES), lambda i: (0, 0)),     # w3 fused heads
            pl.BlockSpec((3, 2 * HIDDEN), lambda i: (0, 0)),             # packed biases
        ],
        out_specs=pl.BlockSpec((TB, OUT_LANES), lambda i: (i, 0)),
        compiler_params=pltpu.CompilerParams(
            dimension_semantics=("parallel",)),
        cost_estimate=pl.CostEstimate(
            flops=int(flops),
            transcendentals=int(B_pad * (OUT_LANES + 2)),
            bytes_accessed=int(bytes_w + bytes_io)),
    )(state, packed["w1"], packed["w2"], packed["w3"], packed["biases"])

    prob = out[:B, :a_dim]
    log_prob = out[:B, a_dim:2 * a_dim]
    value = out[:B, 2 * a_dim:2 * a_dim + 1]
    return prob, log_prob, value


# ----------------------------------------------------------------------------
# Deterministic parameter construction (synthetic, not a checkpoint load).
# ----------------------------------------------------------------------------
def make_params(key, s_dim, a_dim, hidden=HIDDEN):
    def lin(k, fan_in, fan_out):
        kw, kb = jax.random.split(k)
        bound = 1.0 / jnp.sqrt(fan_in)
        w = jax.random.uniform(kw, (fan_in, fan_out), jnp.float32, -bound, bound)
        b = jax.random.uniform(kb, (1, fan_out), jnp.float32, -bound, bound)
        return w, b

    keys = jax.random.split(key, 6)
    wa1, ba1 = lin(keys[0], s_dim, hidden)
    wa2, ba2 = lin(keys[1], hidden, hidden)
    wa3, ba3 = lin(keys[2], hidden, a_dim)
    wc1, bc1 = lin(keys[3], s_dim, hidden)
    wc2, bc2 = lin(keys[4], hidden, hidden)
    wc3, bc3 = lin(keys[5], hidden, 1)
    return dict(
        wa1=wa1, ba1=ba1, wa2=wa2, ba2=ba2, wa3=wa3, ba3=ba3,
        wc1=wc1, bc1=bc1, wc2=wc2, bc2=bc2, wc3=wc3, bc3=bc3,
    )


def reference_forward(state, p):
    """Pure-JAX f32 reference matching the PyTorch semantics."""
    h = jnp.maximum(state @ p["wa1"] + p["ba1"], 0.0)
    h = jnp.maximum(h @ p["wa2"] + p["ba2"], 0.0)
    logits = h @ p["wa3"] + p["ba3"]
    prob = jax.nn.softmax(logits, axis=-1)
    log_prob = jax.nn.log_softmax(logits, axis=-1)
    c = jnp.maximum(state @ p["wc1"] + p["bc1"], 0.0)
    c = jnp.maximum(c @ p["wc2"] + p["bc2"], 0.0)
    value = c @ p["wc3"] + p["bc3"]
    return prob, log_prob, value


if __name__ == "__main__":
    B, S_DIM, A_DIM = 8, 32, 8

    key = jax.random.PRNGKey(0)
    k_state, k_params = jax.random.split(key)
    state = jax.random.normal(k_state, (B, S_DIM), dtype=jnp.float32)
    params = make_params(k_params, S_DIM, A_DIM)
    packed = pack_params(params)          # one-time weight fusion + bf16 cast (cold path)

    prob, log_prob, value = network_forward(state, packed, A_DIM)
    jax.block_until_ready((prob, log_prob, value))

    # Sanity check against the f32 pure-JAX reference. Tolerance is relaxed
    # versus f32-exact parity because the MXU operands are bf16 (accumulation
    # stays f32); observed error is O(1e-3) at these shapes.
    rp, rlp, rv = reference_forward(state, params)
    assert jnp.allclose(prob, rp, atol=2e-2), "prob mismatch"
    assert jnp.allclose(log_prob, rlp, atol=2e-2), "log_prob mismatch"
    assert jnp.allclose(value, rv, atol=2e-2), "value mismatch"
    assert jnp.allclose(jnp.sum(prob, axis=-1), 1.0, atol=1e-3), "prob not normalized"
    assert prob.shape == (B, A_DIM) and log_prob.shape == (B, A_DIM)
    assert value.shape == (B, 1)

    print("KERNEL_OK")
</pallas_src>

<mosaic_0001>
module attributes {stable_mosaic.version = 11 : i64} {
  func.func @_network_kernel(%arg0: i32, %arg1: memref<8x32xf32, #tpu.memory_space<vmem>>, %arg2: memref<32x512xbf16, #tpu.memory_space<vmem>>, %arg3: memref<2x256x256xbf16, #tpu.memory_space<vmem>>, %arg4: memref<512x128xbf16, #tpu.memory_space<vmem>>, %arg5: memref<3x512xf32, #tpu.memory_space<vmem>>, %arg6: memref<8x128xf32, #tpu.memory_space<vmem>>) attributes {dimension_semantics = [#tpu.dimension_semantics<parallel>], iteration_bounds = array<i64: 1>, scalar_prefetch = 0 : i64, scratch_operands = 0 : i64, tpu.core_type = #tpu.core_type<tc>, window_params = [{transform_indices = @transform_0, window_bounds = array<i64: 8, 32>}, {pipeline_mode = #tpu.pipeline_mode<synchronous>, transform_indices = @transform_1, window_bounds = array<i64: 32, 512>}, {pipeline_mode = #tpu.pipeline_mode<synchronous>, transform_indices = @transform_2, window_bounds = array<i64: 2, 256, 256>}, {pipeline_mode = #tpu.pipeline_mode<synchronous>, transform_indices = @transform_3, window_bounds = array<i64: 512, 128>}, {pipeline_mode = #tpu.pipeline_mode<synchronous>, transform_indices = @transform_4, window_bounds = array<i64: 3, 512>}, {transform_indices = @transform_5, window_bounds = array<i64: 8, 128>}]} {
    %c0 = arith.constant 0 : index
    %c0_0 = arith.constant 0 : index
    %0 = vector.load %arg1[%c0, %c0_0] : memref<8x32xf32, #tpu.memory_space<vmem>>, vector<8x32xf32>
    %1 = arith.truncf %0 : vector<8x32xf32> to vector<8x32xbf16>
    %c0_1 = arith.constant 0 : index
    %c0_2 = arith.constant 0 : index
    %2 = vector.load %arg5[%c0_1, %c0_2] : memref<3x512xf32, #tpu.memory_space<vmem>>, vector<1x512xf32>
    %c1 = arith.constant 1 : index
    %c0_3 = arith.constant 0 : index
    %3 = vector.load %arg5[%c1, %c0_3] : memref<3x512xf32, #tpu.memory_space<vmem>>, vector<1x256xf32>
    %c1_4 = arith.constant 1 : index
    %c256 = arith.constant 256 : index
    %4 = vector.load %arg5[%c1_4, %c256] : memref<3x512xf32, #tpu.memory_space<vmem>>, vector<1x256xf32>
    %c2 = arith.constant 2 : index
    %c0_5 = arith.constant 0 : index
    %5 = vector.load %arg5[%c2, %c0_5] : memref<3x512xf32, #tpu.memory_space<vmem>>, vector<1x128xf32>
    %c0_6 = arith.constant 0 : index
    %c0_7 = arith.constant 0 : index
    %6 = vector.load %arg2[%c0_6, %c0_7] : memref<32x512xbf16, #tpu.memory_space<vmem>>, vector<32x512xbf16>
    %cst = arith.constant dense<0.000000e+00> : vector<8x512xf32>
    %7 = tpu.matmul %1, %6, %cst {dimension_numbers = #tpu.dot_dimension_numbers<[1], [0], [0], [1], [0, 0, 1, 1], [], []>} : vector<8x32xbf16>, vector<32x512xbf16>, vector<8x512xf32> -> vector<8x512xf32>
    %8 = vector.broadcast %2 : vector<1x512xf32> to vector<8x512xf32>
    %9 = arith.addf %7, %8 : vector<8x512xf32>
    %cst_8 = arith.constant 0.000000e+00 : f32
    %10 = vector.broadcast %cst_8 : f32 to vector<8x512xf32>
    %11 = arith.maximumf %9, %10 : vector<8x512xf32>
    %12 = arith.truncf %11 : vector<8x512xf32> to vector<8x512xbf16>
    %13 = vector.extract_strided_slice %12 {offsets = [0, 0], sizes = [8, 256], strides = [1, 1]} : vector<8x512xbf16> to vector<8x256xbf16>
    %c0_9 = arith.constant 0 : index
    %c0_10 = arith.constant 0 : index
    %c0_11 = arith.constant 0 : index
    %14 = vector.load %arg3[%c0_9, %c0_10, %c0_11] : memref<2x256x256xbf16, #tpu.memory_space<vmem>>, vector<1x256x256xbf16>
    %15 = vector.shape_cast %14 : vector<1x256x256xbf16> to vector<256x256xbf16>
    %cst_12 = arith.constant dense<0.000000e+00> : vector<8x256xf32>
    %16 = tpu.matmul %13, %15, %cst_12 {dimension_numbers = #tpu.dot_dimension_numbers<[1], [0], [0], [1], [0, 0, 1, 1], [], []>} : vector<8x256xbf16>, vector<256x256xbf16>, vector<8x256xf32> -> vector<8x256xf32>
    %17 = vector.broadcast %3 : vector<1x256xf32> to vector<8x256xf32>
    %18 = arith.addf %16, %17 : vector<8x256xf32>
    %cst_13 = arith.constant 0.000000e+00 : f32
    %19 = vector.broadcast %cst_13 : f32 to vector<8x256xf32>
    %20 = arith.maximumf %18, %19 : vector<8x256xf32>
    %21 = arith.truncf %20 : vector<8x256xf32> to vector<8x256xbf16>
    %22 = vector.extract_strided_slice %12 {offsets = [0, 256], sizes = [8, 256], strides = [1, 1]} : vector<8x512xbf16> to vector<8x256xbf16>
    %c1_14 = arith.constant 1 : index
    %c0_15 = arith.constant 0 : index
    %c0_16 = arith.constant 0 : index
    %23 = vector.load %arg3[%c1_14, %c0_15, %c0_16] : memref<2x256x256xbf16, #tpu.memory_space<vmem>>, vector<1x256x256xbf16>
    %24 = vector.shape_cast %23 : vector<1x256x256xbf16> to vector<256x256xbf16>
    %cst_17 = arith.constant dense<0.000000e+00> : vector<8x256xf32>
    %25 = tpu.matmul %22, %24, %cst_17 {dimension_numbers = #tpu.dot_dimension_numbers<[1], [0], [0], [1], [0, 0, 1, 1], [], []>} : vector<8x256xbf16>, vector<256x256xbf16>, vector<8x256xf32> -> vector<8x256xf32>
    %26 = vector.broadcast %4 : vector<1x256xf32> to vector<8x256xf32>
    %27 = arith.addf %25, %26 : vector<8x256xf32>
    %cst_18 = arith.constant 0.000000e+00 : f32
    %28 = vector.broadcast %cst_18 : f32 to vector<8x256xf32>
    %29 = arith.maximumf %27, %28 : vector<8x256xf32>
    %30 = arith.truncf %29 : vector<8x256xf32> to vector<8x256xbf16>
    %c0_19 = arith.constant 0 : index
    %c0_20 = arith.constant 0 : index
    %31 = vector.load %arg4[%c0_19, %c0_20] : memref<512x128xbf16, #tpu.memory_space<vmem>>, vector<256x128xbf16>
    %cst_21 = arith.constant dense<0.000000e+00> : vector<8x128xf32>
    %32 = tpu.matmul %21, %31, %cst_21 {dimension_numbers = #tpu.dot_dimension_numbers<[1], [0], [0], [1], [0, 0, 1, 1], [], []>} : vector<8x256xbf16>, vector<256x128xbf16>, vector<8x128xf32> -> vector<8x128xf32>
    %c256_22 = arith.constant 256 : index
    %c0_23 = arith.constant 0 : index
    %33 = vector.load %arg4[%c256_22, %c0_23] : memref<512x128xbf16, #tpu.memory_space<vmem>>, vector<256x128xbf16>
    %cst_24 = arith.constant dense<0.000000e+00> : vector<8x128xf32>
    %34 = tpu.matmul %30, %33, %cst_24 {dimension_numbers = #tpu.dot_dimension_numbers<[1], [0], [0], [1], [0, 0, 1, 1], [], []>} : vector<8x256xbf16>, vector<256x128xbf16>, vector<8x128xf32> -> vector<8x128xf32>
    %35 = arith.addf %32, %34 : vector<8x128xf32>
    %36 = vector.broadcast %5 : vector<1x128xf32> to vector<8x128xf32>
    %37 = arith.addf %35, %36 : vector<8x128xf32>
    %38 = tpu.iota {dimensions = array<i32: 1>} : vector<8x128xi32>
    %c8_i32 = arith.constant 8 : i32
    %39 = vector.broadcast %c8_i32 : i32 to vector<8x128xi32>
    %40 = arith.cmpi slt, %38, %39 : vector<8x128xi32>
    %cst_25 = arith.constant 0xFF800000 : f32
    %41 = vector.broadcast %cst_25 : f32 to vector<8x128xf32>
    %42 = arith.select %40, %37, %41 : vector<8x128xi1>, vector<8x128xf32>
    %cst_26 = arith.constant dense<0xFF800000> : vector<8xf32>
    %43 = vector.multi_reduction <maximumf>, %42, %cst_26 [1] : vector<8x128xf32> to vector<8xf32>
    %44 = vector.shape_cast %43 : vector<8xf32> to vector<8x1xf32>
    %45 = vector.broadcast %44 : vector<8x1xf32> to vector<8x128xf32>
    %46 = arith.subf %42, %45 : vector<8x128xf32>
    %47 = math.exp %46 : vector<8x128xf32>
    %cst_27 = arith.constant dense<0.000000e+00> : vector<8xf32>
    %48 = vector.multi_reduction <add>, %47, %cst_27 [1] : vector<8x128xf32> to vector<8xf32>
    %49 = vector.shape_cast %48 : vector<8xf32> to vector<8x1xf32>
    %50 = tpu.reciprocal %49 : vector<8x1xf32> -> vector<8x1xf32>
    %51 = vector.broadcast %50 : vector<8x1xf32> to vector<8x128xf32>
    %52 = arith.mulf %47, %51 : vector<8x128xf32>
    %53 = vector.broadcast %44 : vector<8x1xf32> to vector<8x128xf32>
    %54 = arith.subf %37, %53 : vector<8x128xf32>
    %55 = math.log %49 : vector<8x1xf32>
    %56 = vector.broadcast %55 : vector<8x1xf32> to vector<8x128xf32>
    %57 = arith.subf %54, %56 : vector<8x128xf32>
    %c16_i32 = arith.constant 16 : i32
    %58 = vector.broadcast %c16_i32 : i32 to vector<8x128xi32>
    %59 = arith.cmpi slt, %38, %58 : vector<8x128xi32>
    %c16_i32_28 = arith.constant 16 : i32
    %60 = vector.broadcast %c16_i32_28 : i32 to vector<8x128xi32>
    %61 = arith.cmpi eq, %38, %60 : vector<8x128xi32>
    %cst_29 = arith.constant 0.000000e+00 : f32
    %62 = vector.broadcast %cst_29 : f32 to vector<8x128xf32>
    %63 = arith.select %61, %37, %62 : vector<8x128xi1>, vector<8x128xf32>
    %64 = arith.select %59, %57, %63 : vector<8x128xi1>, vector<8x128xf32>
    %65 = arith.select %40, %52, %64 : vector<8x128xi1>, vector<8x128xf32>
    %c0_30 = arith.constant 0 : index
    %c0_31 = arith.constant 0 : index
    %66 = vector.load %arg6[%c0_30, %c0_31] : memref<8x128xf32, #tpu.memory_space<vmem>>, vector<8x128xf32>
    tpu.vector_store %arg6[%c0_30, %c0_31], %65 {strides = array<i32>} : memref<8x128xf32, #tpu.memory_space<vmem>>, vector<8x128xf32>,
    return
  }
  func.func @transform_0(%arg0: i32) -> (i32, i32) {
    %c0_i32 = arith.constant 0 : i32
    %c0_i32_0 = arith.constant 0 : i32
    return %arg0, %c0_i32 : i32, i32
  }
  func.func @transform_1(%arg0: i32) -> (i32, i32) {
    %c0_i32 = arith.constant 0 : i32
    %c0_i32_0 = arith.constant 0 : i32
    %c0_i32_1 = arith.constant 0 : i32
    return %c0_i32, %c0_i32_0 : i32, i32
  }
  func.func @transform_2(%arg0: i32) -> (i32, i32, i32) {
    %c0_i32 = arith.constant 0 : i32
    %c0_i32_0 = arith.constant 0 : i32
    %c0_i32_1 = arith.constant 0 : i32
    %c0_i32_2 = arith.constant 0 : i32
    return %c0_i32, %c0_i32_0, %c0_i32_1 : i32, i32, i32
  }
  func.func @transform_3(%arg0: i32) -> (i32, i32) {
    %c0_i32 = arith.constant 0 : i32
    %c0_i32_0 = arith.constant 0 : i32
    %c0_i32_1 = arith.constant 0 : i32
    return %c0_i32, %c0_i32_0 : i32, i32
  }
  func.func @transform_4(%arg0: i32) -> (i32, i32) {
    %c0_i32 = arith.constant 0 : i32
    %c0_i32_0 = arith.constant 0 : i32
    %c0_i32_1 = arith.constant 0 : i32
    return %c0_i32, %c0_i32_0 : i32, i32
  }
  func.func @transform_5(%arg0: i32) -> (i32, i32) {
    %c0_i32 = arith.constant 0 : i32
    %c0_i32_0 = arith.constant 0 : i32
    return %arg0, %c0_i32 : i32, i32
  }
}

</mosaic_0001>

<llo_original>
// kernel: tpu_custom_call.1
$region0: #{tpu_custom_call.1}
  #allocation0 [shape = 'u32[]', space=smem, size = 0x4, offset = 0x4, fixed_abs, tag = 'smem constant byte address 0x4 - core index']
  #allocation1 [shape = 'u32[144,128]{1,0:T(1,128)}', space=vmem, size = 0x12000, scoped, tag = 'internal scratch']
  %s0 = inlined_call_operand.hbm [shape: f32[8,32], index: 0, kind: input, shape index: {}]
  %s1 = inlined_call_operand.hbm [shape: bf16[32,512], index: 1, kind: input, shape index: {}]
  %s2 = inlined_call_operand.hbm [shape: bf16[2,256,256], index: 2, kind: input, shape index: {}]
  %s3 = inlined_call_operand.hbm [shape: bf16[512,128], index: 3, kind: input, shape index: {}]
  %s4 = inlined_call_operand.hbm [shape: f32[3,512], index: 4, kind: input, shape index: {}]
  %s5 = inlined_call_operand.hbm [shape: f32[8,128], index: 5, kind: output, shape index: {}]
  %s6 = sld [smem:[#allocation0]]
  $region50: #{tpu_custom_call.1} parent=0
    _
  %s8 = ssub.s32 1, %s6
  %s9 = scalar_select 0, %s8, %s6
  $region1: #{tpu_custom_call.1} parent=0
    #allocation2 [shape = 'u8[4096]{0}', space=vmem, size = 0x1000, scoped, tag = 'input window, operand 0, single buffered']
    #allocation3 [shape = 's32[1]{0}', space=sflag, size = 0x4, scoped, tag = 'scoped memory for tpu_custom_call.1']
    #allocation4 [shape = 's32[1]{0}', space=sflag, size = 0x4, scoped, tag = 'scoped memory for tpu_custom_call.1']
    #allocation5 [shape = 'u8[32768]{0}', space=vmem, size = 0x8000, scoped, tag = 'input window, operand 1, single buffered']
    #allocation6 [shape = 's32[1]{0}', space=sflag, size = 0x4, scoped, tag = 'scoped memory for tpu_custom_call.1']
    #allocation7 [shape = 'u8[262144]{0}', space=vmem, size = 0x40000, scoped, tag = 'input window, operand 2, single buffered']
    #allocation8 [shape = 'u8[131072]{0}', space=vmem, size = 0x20000, scoped, tag = 'input window, operand 3, single buffered']
    #allocation9 [shape = 's32[1]{0}', space=sflag, size = 0x4, scoped, tag = 'scoped memory for tpu_custom_call.1']
    #allocation10 [shape = 'u8[8192]{0}', space=vmem, size = 0x2000, scoped, tag = 'input window, operand 4, single buffered']
    #allocation11 [shape = 'u8[4096]{0}', space=vmem, size = 0x1000, scoped, tag = 'output window, operand 0, single buffered']
    %10 = vsyncpa [#allocation3], 0
    %11 = vsyncpa [#allocation6], 0
    %12 = vsyncpa [#allocation9], 0
    %13 = vsyncpa [#allocation4], 0
    // Predicated region
    $region2: #{tpu_custom_call.1} parent=1 // pred_check
      _
    $region3: #{tpu_custom_call.1} parent=1 // pred_check_branch
      %15 = sbr.rel (0) target = $region5
    $region4: #{tpu_custom_call.1} parent=1 // pred_region
      %s17 = ssub.s32 128, 128
      %18 = vsyncadd [#allocation3], %s17
      %s20 = sshll.u32 [#allocation2], 4
      %s21 = int_to_ptr.vmem [resolvable:$true] %s20
      %23 = dma.hbm_to_vmem [thread:$0]  %s0, 128, %s21, [#allocation3]
    $region5: #{tpu_custom_call.1} parent=1 // pred_fallthru
      _
    // Predicated region
    $region6: #{tpu_custom_call.1} parent=1 // pred_check
      _
    $region7: #{tpu_custom_call.1} parent=1 // pred_check_branch
      %25 = sbr.rel (0) target = $region9
    $region8: #{tpu_custom_call.1} parent=1 // pred_region
      %s27 = ssub.s32 1024, 1024
      %28 = vsyncadd [#allocation6], %s27
      %s29 = sshll.u32 [#allocation5], 4
      %s30 = int_to_ptr.vmem [resolvable:$true] %s29
      %35 = dma.hbm_to_vmem [thread:$0]  %s1, 1024, %s30, [#allocation6], 256, 256, 16
    $region9: #{tpu_custom_call.1} parent=1 // pred_fallthru
      _
    // Predicated region
    $region10: #{tpu_custom_call.1} parent=1 // pred_check
      _
    $region11: #{tpu_custom_call.1} parent=1 // pred_check_branch
      %37 = sbr.rel (0) target = $region13
    $region12: #{tpu_custom_call.1} parent=1 // pred_region
      %s39 = ssub.s32 8192, 8192
      %40 = vsyncadd [#allocation6], %s39
      %s41 = sshll.u32 [#allocation7], 4
      %s42 = int_to_ptr.vmem [resolvable:$true] %s41
      %47 = dma.hbm_to_vmem [thread:$0]  %s2, 8192, %s42, [#allocation6], 128, 128, 8
    $region13: #{tpu_custom_call.1} parent=1 // pred_fallthru
      _
    // Predicated region
    $region14: #{tpu_custom_call.1} parent=1 // pred_check
      _
    $region15: #{tpu_custom_call.1} parent=1 // pred_check_branch
      %49 = sbr.rel (0) target = $region17
    $region16: #{tpu_custom_call.1} parent=1 // pred_region
      %s51 = ssub.s32 4096, 4096
      %52 = vsyncadd [#allocation9], %s51
      %s53 = sshll.u32 [#allocation8], 4
      %s54 = int_to_ptr.vmem [resolvable:$true] %s53
      %59 = dma.hbm_to_vmem [thread:$0]  %s3, 4096, %s54, [#allocation9], 64, 64, 4
    $region17: #{tpu_custom_call.1} parent=1 // pred_fallthru
      _
    // Predicated region
    $region18: #{tpu_custom_call.1} parent=1 // pred_check
      _
    $region19: #{tpu_custom_call.1} parent=1 // pred_check_branch
      %61 = sbr.rel (0) target = $region21
    $region20: #{tpu_custom_call.1} parent=1 // pred_region
      %s63 = ssub.s32 256, 256
      %64 = vsyncadd [#allocation9], %s63
      %s66 = sshll.u32 [#allocation10], 4
      %s67 = int_to_ptr.vmem [resolvable:$true] %s66
      %69 = dma.hbm_to_vmem [thread:$0]  %s4, 256, %s67, [#allocation9]
    $region21: #{tpu_custom_call.1} parent=1 // pred_fallthru
      _
    // Predicated region
    $region22: #{tpu_custom_call.1} parent=1 // pred_check
      _
    $region23: #{tpu_custom_call.1} parent=1 // pred_check_branch
      %71 = sbr.rel (0) target = $region25
    $region24: #{tpu_custom_call.1} parent=1 // pred_region
      %72 = dma.done [#allocation3], 128
    $region25: #{tpu_custom_call.1} parent=1 // pred_fallthru
      _
    // Predicated region
    $region26: #{tpu_custom_call.1} parent=1 // pred_check
      _
    $region27: #{tpu_custom_call.1} parent=1 // pred_check_branch
      %74 = sbr.rel (0) target = $region29
    $region28: #{tpu_custom_call.1} parent=1 // pred_region
      %75 = dma.done [#allocation6], 1024
    $region29: #{tpu_custom_call.1} parent=1 // pred_fallthru
      _
    // Predicated region
    $region30: #{tpu_custom_call.1} parent=1 // pred_check
      _
    $region31: #{tpu_custom_call.1} parent=1 // pred_check_branch
      %77 = sbr.rel (0) target = $region33
    $region32: #{tpu_custom_call.1} parent=1 // pred_region
      %78 = dma.done [#allocation6], 8192
    $region33: #{tpu_custom_call.1} parent=1 // pred_fallthru
      _
    // Predicated region
    $region34: #{tpu_custom_call.1} parent=1 // pred_check
      _
    $region35: #{tpu_custom_call.1} parent=1 // pred_check_branch
      %80 = sbr.rel (0) target = $region37
    $region36: #{tpu_custom_call.1} parent=1 // pred_region
      %81 = dma.done [#allocation9], 4096
    $region37: #{tpu_custom_call.1} parent=1 // pred_fallthru
      _
    // Predicated region
    $region38: #{tpu_custom_call.1} parent=1 // pred_check
      _
    $region39: #{tpu_custom_call.1} parent=1 // pred_check_branch
      %83 = sbr.rel (0) target = $region41
    $region40: #{tpu_custom_call.1} parent=1 // pred_region
      %84 = dma.done [#allocation9], 256
    $region41: #{tpu_custom_call.1} parent=1 // pred_fallthru
      _
    %v86 = vld [vmem:[#allocation2] sm:$0xff]
    %v87 = vpack.c.bf16 %v86, %v86
    %v88 = vld [vmem:[#allocation10] ss:$4 sm:$0xf]
    %s89 = scalar_lea.vmem [#allocation10], 1
    %v90 = vld [vmem:[%s89] ss:$4 sm:$0x3]
    %s91 = scalar_lea.vmem [#allocation10], 9
    %v92 = vld [vmem:[%s91] ss:$4 sm:$0x3]
    %v93 = vld [vmem:[#allocation10 + $0x2] sm:$0x1]
    %v94 = vld [vmem:[#allocation5] sm:$0xff]
    %v95 = vld [vmem:[#allocation5 + $0x8] sm:$0xff]
    %v96 = vld [vmem:[#allocation5 + $0x10] sm:$0xff]
    %v97 = vld [vmem:[#allocation5 + $0x18] sm:$0xff]
    %v98 = vld [vmem:[#allocation5 + $0x20] sm:$0xff]
    %v99 = vld [vmem:[#allocation5 + $0x28] sm:$0xff]
    %v100 = vld [vmem:[#allocation5 + $0x30] sm:$0xff]
    %v101 = vld [vmem:[#allocation5 + $0x38] sm:$0xff]
    %v103 = vlaneseq
    %v104 = vshrl.u32 %v103, 7
    %v105 = vsub.s32 0, %v104
    %v106 = vrot.slane %v88, %v105
    %v107 = vlaneseq
    %v108 = vshrl.u32 %v107, 7
    %v109 = vsub.s32 1, %v108
    %v110 = vrot.slane %v88, %v109
    %v111 = vlaneseq
    %v112 = vshrl.u32 %v111, 7
    %v113 = vsub.s32 2, %v112
    %v114 = vrot.slane %v88, %v113
    %v115 = vlaneseq
    %v116 = vshrl.u32 %v115, 7
    %v117 = vsub.s32 3, %v116
    %v118 = vrot.slane %v88, %v117
    %v131 = vunpack.c.l.b16 %v94
    %v132 = vunpack.c.h.b16 %v94
    %v133 = vunpack.c.l.b16 %v95
    %v134 = vunpack.c.h.b16 %v95
    %v135 = vunpack.c.l.b16 %v96
    %v136 = vunpack.c.h.b16 %v96
    %v137 = vunpack.c.l.b16 %v97
    %v138 = vunpack.c.h.b16 %v97
    %v139 = vunpack.c.l.b16 %v98
    %v140 = vunpack.c.h.b16 %v98
    %v141 = vunpack.c.l.b16 %v99
    %v142 = vunpack.c.h.b16 %v99
    %v143 = vunpack.c.l.b16 %v100
    %v144 = vunpack.c.h.b16 %v100
    %v145 = vunpack.c.l.b16 %v101
    %v146 = vunpack.c.h.b16 %v101
    %v147 = vpack.c.b16 %v135, %v131
    %v148 = vpack.c.b16 %v136, %v132
    %v149 = vpack.c.b16 %v137, %v133
    %v150 = vpack.c.b16 %v138, %v134
    %v151 = vpack.c.b16 %v143, %v139
    %v152 = vpack.c.b16 %v144, %v140
    %v153 = vpack.c.b16 %v145, %v141
    %v154 = vpack.c.b16 %v146, %v142
    %vm163 = vcmask 261120
    %v165 = vsel %vm163, %v87, 0
    %167 = vmatprep.subr.bf16.mxu0 %v148
    %168 = vmatpush1.bf16.msra.mxu0 %v147
    %169 = vmatprep.subr.bf16.mxu0 %v152
    %170 = vmatpush1.bf16.msra.mxu0 %v151
    %171 = vmatprep.subr.bf16.mxu0 0
    %172 = vmatpush1.bf16.msra.mxu0 0
    %173 = vmatprep.subr.bf16.mxu0 0
    %174 = vmatpush1.bf16.msra.mxu0 0
    %175 = vmatprep.subr.bf16.mxu0 0
    %176 = vmatpush1.bf16.msra.mxu0 0
    %177 = vmatprep.subr.bf16.mxu0 0
    %178 = vmatpush1.bf16.msra.mxu0 0
    %179 = vmatprep.subr.bf16.mxu0 0
    %180 = vmatpush1.bf16.msra.mxu0 0
    %181 = vmatprep.subr.bf16.mxu0 0
    %182 = vmatpush1.bf16.msra.mxu0 0
    %183 = vmatprep.subr.bf16.mxu0 0
    %184 = vmatpush1.bf16.msra.mxu0 0
    %185 = vmatprep.subr.bf16.mxu0 0
    %186 = vmatpush1.bf16.msra.mxu0 0
    %187 = vmatprep.subr.bf16.mxu0 0
    %188 = vmatpush1.bf16.msra.mxu0 0
    %189 = vmatprep.subr.bf16.mxu0 0
    %190 = vmatpush1.bf16.msra.mxu0 0
    %191 = vmatprep.subr.bf16.mxu0 0
    %192 = vmatpush1.bf16.msra.mxu0 0
    %193 = vmatprep.subr.bf16.mxu0 0
    %194 = vmatpush1.bf16.msra.mxu0 0
    %195 = vmatprep.subr.bf16.mxu0 0
    %196 = vmatpush1.bf16.msra.mxu0 0
    %197 = vmatprep.subr.bf16.mxu0 0
    %198 = vmatpush1.bf16.msra.mxu0 0
    %199 = vmatprep.mubr.bf16.mxu0 0
    %200 = vmatmul.mubr.bf16.gmra.mrb[0].mxu0 %v165
    %v201 = vpop.f32.mrb[0].mxu0
    %v202 = vadd.f32 %v106, %v201
    %v203 = vpop.f32.mrb[0].mxu0
    %v204 = vadd.f32 %v110, %v203
    %v205 = vpop.f32.mrb[0].mxu0
    %v206 = vpop.f32.mrb[0].mxu0
    %207 = vdwg.mxu0
    %208 = vmatprep.subr.bf16.mxu0 %v150
    %209 = vmatpush1.bf16.msra.mxu0 %v149
    %210 = vmatprep.subr.bf16.mxu0 %v154
    %211 = vmatpush1.bf16.msra.mxu0 %v153
    %212 = vmatprep.subr.bf16.mxu0 0
    %213 = vmatpush1.bf16.msra.mxu0 0
    %214 = vmatprep.subr.bf16.mxu0 0
    %215 = vmatpush1.bf16.msra.mxu0 0
    %216 = vmatprep.subr.bf16.mxu0 0
    %217 = vmatpush1.bf16.msra.mxu0 0
    %218 = vmatprep.subr.bf16.mxu0 0
    %219 = vmatpush1.bf16.msra.mxu0 0
    %220 = vmatprep.subr.bf16.mxu0 0
    %221 = vmatpush1.bf16.msra.mxu0 0
    %222 = vmatprep.subr.bf16.mxu0 0
    %223 = vmatpush1.bf16.msra.mxu0 0
    %224 = vmatprep.subr.bf16.mxu0 0
    %225 = vmatpush1.bf16.msra.mxu0 0
    %226 = vmatprep.subr.bf16.mxu0 0
    %227 = vmatpush1.bf16.msra.mxu0 0
    %228 = vmatprep.subr.bf16.mxu0 0
    %229 = vmatpush1.bf16.msra.mxu0 0
    %230 = vmatprep.subr.bf16.mxu0 0
    %231 = vmatpush1.bf16.msra.mxu0 0
    %232 = vmatprep.subr.bf16.mxu0 0
    %233 = vmatpush1.bf16.msra.mxu0 0
    %234 = vmatprep.subr.bf16.mxu0 0
    %235 = vmatpush1.bf16.msra.mxu0 0
    %236 = vmatprep.subr.bf16.mxu0 0
    %237 = vmatpush1.bf16.msra.mxu0 0
    %238 = vmatprep.subr.bf16.mxu0 0
    %239 = vmatpush1.bf16.msra.mxu0 0
    %240 = vmatprep.mubr.bf16.mxu0 0
    %241 = vmatmul.mubr.bf16.gmra.mrb[0].mxu0 %v165
    %v242 = vpop.f32.mrb[0].mxu0
    %v243 = vadd.f32 %v114, %v242
    %v244 = vpop.f32.mrb[0].mxu0
    %v245 = vadd.f32 %v118, %v244
    %v246 = vpop.f32.mrb[0].mxu0
    %v247 = vpop.f32.mrb[0].mxu0
    %248 = vdwg.mxu0
    %v249 = vmax.f32 %v202, 0.0
    %v250 = vmax.f32 %v204, 0.0
    %v251 = vmax.f32 %v243, 0.0
    %v252 = vmax.f32 %v245, 0.0
    %v253 = vpack.c.bf16 %v249, %v249
    %v254 = vpack.c.bf16 %v250, %v250
    %v255 = vpack.c.bf16 %v251, %v251
    %v256 = vpack.c.bf16 %v252, %v252
    %v257 = vld [vmem:[#allocation7] sm:$0xff]
    %v258 = vld [vmem:[#allocation7 + $0x8] sm:$0xff]
    %v259 = vld [vmem:[#allocation7 + $0x10] sm:$0xff]
    %v260 = vld [vmem:[#allocation7 + $0x18] sm:$0xff]
    %v261 = vld [vmem:[#allocation7 + $0x20] sm:$0xff]
    %v262 = vld [vmem:[#allocation7 + $0x28] sm:$0xff]
    %v263 = vld [vmem:[#allocation7 + $0x30] sm:$0xff]
    %v264 = vld [vmem:[#allocation7 + $0x38] sm:$0xff]
    %v265 = vld [vmem:[#allocation7 + $0x40] sm:$0xff]
    %v266 = vld [vmem:[#allocation7 + $0x48] sm:$0xff]
    %v267 = vld [vmem:[#allocation7 + $0x50] sm:$0xff]
    %v268 = vld [vmem:[#allocation7 + $0x58] sm:$0xff]
    %v269 = vld [vmem:[#allocation7 + $0x60] sm:$0xff]
    %v270 = vld [vmem:[#allocation7 + $0x68] sm:$0xff]
    %v271 = vld [vmem:[#allocation7 + $0x70] sm:$0xff]
    %v272 = vld [vmem:[#allocation7 + $0x78] sm:$0xff]
    %v273 = vld [vmem:[#allocation7 + $0x80] sm:$0xff]
    %v274 = vld [vmem:[#allocation7 + $0x88] sm:$0xff]
    %v275 = vld [vmem:[#allocation7 + $0x90] sm:$0xff]
    %v276 = vld [vmem:[#allocation7 + $0x98] sm:$0xff]
    %v277 = vld [vmem:[#allocation7 + $0xa0] sm:$0xff]
    %v278 = vld [vmem:[#allocation7 + $0xa8] sm:$0xff]
    %v279 = vld [vmem:[#allocation7 + $0xb0] sm:$0xff]
    %v280 = vld [vmem:[#allocation7 + $0xb8] sm:$0xff]
    %v281 = vld [vmem:[#allocation7 + $0xc0] sm:$0xff]
    %v282 = vld [vmem:[#allocation7 + $0xc8] sm:$0xff]
    %v283 = vld [vmem:[#allocation7 + $0xd0] sm:$0xff]
    %v284 = vld [vmem:[#allocation7 + $0xd8] sm:$0xff]
    %v285 = vld [vmem:[#allocation7 + $0xe0] sm:$0xff]
    %v286 = vld [vmem:[#allocation7 + $0xe8] sm:$0xff]
    %v287 = vld [vmem:[#allocation7 + $0xf0] sm:$0xff]
    %v288 = vld [vmem:[#allocation7 + $0xf8] sm:$0xff]
    %v290 = vlaneseq
    %v291 = vshrl.u32 %v290, 7
    %v292 = vsub.s32 0, %v291
    %v293 = vrot.slane %v90, %v292
    %v294 = vlaneseq
    %v295 = vshrl.u32 %v294, 7
    %v296 = vsub.s32 1, %v295
    %v297 = vrot.slane %v90, %v296
    %v332 = vunpack.c.l.b16 %v257
    %v333 = vunpack.c.h.b16 %v257
    %v334 = vunpack.c.l.b16 %v258
    %v335 = vunpack.c.h.b16 %v258
    %v336 = vunpack.c.l.b16 %v259
    %v337 = vunpack.c.h.b16 %v259
    %v338 = vunpack.c.l.b16 %v260
    %v339 = vunpack.c.h.b16 %v260
    %v340 = vunpack.c.l.b16 %v261
    %v341 = vunpack.c.h.b16 %v261
    %v342 = vunpack.c.l.b16 %v262
    %v343 = vunpack.c.h.b16 %v262
    %v344 = vunpack.c.l.b16 %v263
    %v345 = vunpack.c.h.b16 %v263
    %v346 = vunpack.c.l.b16 %v264
    %v347 = vunpack.c.h.b16 %v264
    %v348 = vunpack.c.l.b16 %v265
    %v349 = vunpack.c.h.b16 %v265
    %v350 = vunpack.c.l.b16 %v266
    %v351 = vunpack.c.h.b16 %v266
    %v352 = vunpack.c.l.b16 %v267
    %v353 = vunpack.c.h.b16 %v267
    %v354 = vunpack.c.l.b16 %v268
    %v355 = vunpack.c.h.b16 %v268
    %v356 = vunpack.c.l.b16 %v269
    %v357 = vunpack.c.h.b16 %v269
    %v358 = vunpack.c.l.b16 %v270
    %v359 = vunpack.c.h.b16 %v270
    %v360 = vunpack.c.l.b16 %v271
    %v361 = vunpack.c.h.b16 %v271
    %v362 = vunpack.c.l.b16 %v272
    %v363 = vunpack.c.h.b16 %v272
    %v364 = vunpack.c.l.b16 %v273
    %v365 = vunpack.c.h.b16 %v273
    %v366 = vunpack.c.l.b16 %v274
    %v367 = vunpack.c.h.b16 %v274
    %v368 = vunpack.c.l.b16 %v275
    %v369 = vunpack.c.h.b16 %v275
    %v370 = vunpack.c.l.b16 %v276
    %v371 = vunpack.c.h.b16 %v276
    %v372 = vunpack.c.l.b16 %v277
    %v373 = vunpack.c.h.b16 %v277
    %v374 = vunpack.c.l.b16 %v278
    %v375 = vunpack.c.h.b16 %v278
    %v376 = vunpack.c.l.b16 %v279
    %v377 = vunpack.c.h.b16 %v279
    %v378 = vunpack.c.l.b16 %v280
    %v379 = vunpack.c.h.b16 %v280
    %v380 = vunpack.c.l.b16 %v281
    %v381 = vunpack.c.h.b16 %v281
    %v382 = vunpack.c.l.b16 %v282
    %v383 = vunpack.c.h.b16 %v282
    %v384 = vunpack.c.l.b16 %v283
    %v385 = vunpack.c.h.b16 %v283
    %v386 = vunpack.c.l.b16 %v284
    %v387 = vunpack.c.h.b16 %v284
    %v388 = vunpack.c.l.b16 %v285
    %v389 = vunpack.c.h.b16 %v285
    %v390 = vunpack.c.l.b16 %v286
    %v391 = vunpack.c.h.b16 %v286
    %v392 = vunpack.c.l.b16 %v287
    %v393 = vunpack.c.h.b16 %v287
    %v394 = vunpack.c.l.b16 %v288
    %v395 = vunpack.c.h.b16 %v288
    %v396 = vpack.c.b16 %v334, %v332
    %v397 = vpack.c.b16 %v335, %v333
    %v398 = vpack.c.b16 %v338, %v336
    %v399 = vpack.c.b16 %v339, %v337
    %v400 = vpack.c.b16 %v342, %v340
    %v401 = vpack.c.b16 %v343, %v341
    %v402 = vpack.c.b16 %v346, %v344
    %v403 = vpack.c.b16 %v347, %v345
    %v404 = vpack.c.b16 %v350, %v348
    %v405 = vpack.c.b16 %v351, %v349
    %v406 = vpack.c.b16 %v354, %v352
    %v407 = vpack.c.b16 %v355, %v353
    %v408 = vpack.c.b16 %v358, %v356
    %v409 = vpack.c.b16 %v359, %v357
    %v410 = vpack.c.b16 %v362, %v360
    %v411 = vpack.c.b16 %v363, %v361
    %v412 = vpack.c.b16 %v366, %v364
    %v413 = vpack.c.b16 %v367, %v365
    %v414 = vpack.c.b16 %v370, %v368
    %v415 = vpack.c.b16 %v371, %v369
    %v416 = vpack.c.b16 %v374, %v372
    %v417 = vpack.c.b16 %v375, %v373
    %v418 = vpack.c.b16 %v378, %v376
    %v419 = vpack.c.b16 %v379, %v377
    %v420 = vpack.c.b16 %v382, %v380
    %v421 = vpack.c.b16 %v383, %v381
    %v422 = vpack.c.b16 %v386, %v384
    %v423 = vpack.c.b16 %v387, %v385
    %v424 = vpack.c.b16 %v390, %v388
    %v425 = vpack.c.b16 %v391, %v389
    %v426 = vpack.c.b16 %v394, %v392
    %v427 = vpack.c.b16 %v395, %v393
    %460 = vmatprep.subr.bf16.mxu0 %v397
    %461 = vmatpush1.bf16.msra.mxu0 %v396
    %462 = vmatprep.subr.bf16.mxu0 %v399
    %463 = vmatpush1.bf16.msra.mxu0 %v398
    %464 = vmatprep.subr.bf16.mxu0 %v401
    %465 = vmatpush1.bf16.msra.mxu0 %v400
    %466 = vmatprep.subr.bf16.mxu0 %v403
    %467 = vmatpush1.bf16.msra.mxu0 %v402
    %468 = vmatprep.subr.bf16.mxu0 %v405
    %469 = vmatpush1.bf16.msra.mxu0 %v404
    %470 = vmatprep.subr.bf16.mxu0 %v407
    %471 = vmatpush1.bf16.msra.mxu0 %v406
    %472 = vmatprep.subr.bf16.mxu0 %v409
    %473 = vmatpush1.bf16.msra.mxu0 %v408
    %474 = vmatprep.subr.bf16.mxu0 %v411
    %475 = vmatpush1.bf16.msra.mxu0 %v410
    %476 = vmatprep.subr.bf16.mxu0 %v413
    %477 = vmatpush1.bf16.msra.mxu0 %v412
    %478 = vmatprep.subr.bf16.mxu0 %v415
    %479 = vmatpush1.bf16.msra.mxu0 %v414
    %480 = vmatprep.subr.bf16.mxu0 %v417
    %481 = vmatpush1.bf16.msra.mxu0 %v416
    %482 = vmatprep.subr.bf16.mxu0 %v419
    %483 = vmatpush1.bf16.msra.mxu0 %v418
    %484 = vmatprep.subr.bf16.mxu0 %v421
    %485 = vmatpush1.bf16.msra.mxu0 %v420
    %486 = vmatprep.subr.bf16.mxu0 %v423
    %487 = vmatpush1.bf16.msra.mxu0 %v422
    %488 = vmatprep.subr.bf16.mxu0 %v425
    %489 = vmatpush1.bf16.msra.mxu0 %v424
    %490 = vmatprep.subr.bf16.mxu0 %v427
    %491 = vmatpush1.bf16.msra.mxu0 %v426
    %492 = vmatprep.mubr.bf16.mxu0 %v254
    %493 = vmatmul.mubr.bf16.gmra.mrb[0].mxu0 %v253
    %v494 = vpop.f32.mrb[0].mxu0
    %v495 = vadd.f32 %v293, %v494
    %v496 = vpop.f32.mrb[0].mxu0
    %v497 = vadd.f32 %v297, %v496
    %v498 = vpop.f32.mrb[0].mxu0
    %v499 = vpop.f32.mrb[0].mxu0
    %500 = vdwg.mxu0
    %v501 = vmax.f32 %v495, 0.0
    %v502 = vmax.f32 %v497, 0.0
    %v503 = vpack.c.bf16 %v501, %v501
    %v504 = vpack.c.bf16 %v502, %v502
    %s505 = scalar_lea.vmem [#allocation7], 256
    %v506 = vld [vmem:[%s505] sm:$0xff]
    %v507 = vld [vmem:[%s505 + $0x8] sm:$0xff]
    %v508 = vld [vmem:[%s505 + $0x10] sm:$0xff]
    %v509 = vld [vmem:[%s505 + $0x18] sm:$0xff]
    %v510 = vld [vmem:[%s505 + $0x20] sm:$0xff]
    %v511 = vld [vmem:[%s505 + $0x28] sm:$0xff]
    %v512 = vld [vmem:[%s505 + $0x30] sm:$0xff]
    %v513 = vld [vmem:[%s505 + $0x38] sm:$0xff]
    %v514 = vld [vmem:[%s505 + $0x40] sm:$0xff]
    %v515 = vld [vmem:[%s505 + $0x48] sm:$0xff]
    %v516 = vld [vmem:[%s505 + $0x50] sm:$0xff]
    %v517 = vld [vmem:[%s505 + $0x58] sm:$0xff]
    %v518 = vld [vmem:[%s505 + $0x60] sm:$0xff]
    %v519 = vld [vmem:[%s505 + $0x68] sm:$0xff]
    %v520 = vld [vmem:[%s505 + $0x70] sm:$0xff]
    %v521 = vld [vmem:[%s505 + $0x78] sm:$0xff]
    %v522 = vld [vmem:[%s505 + $0x80] sm:$0xff]
    %v523 = vld [vmem:[%s505 + $0x88] sm:$0xff]
    %v524 = vld [vmem:[%s505 + $0x90] sm:$0xff]
    %v525 = vld [vmem:[%s505 + $0x98] sm:$0xff]
    %v526 = vld [vmem:[%s505 + $0xa0] sm:$0xff]
    %v527 = vld [vmem:[%s505 + $0xa8] sm:$0xff]
    %v528 = vld [vmem:[%s505 + $0xb0] sm:$0xff]
    %v529 = vld [vmem:[%s505 + $0xb8] sm:$0xff]
    %v530 = vld [vmem:[%s505 + $0xc0] sm:$0xff]
    %v531 = vld [vmem:[%s505 + $0xc8] sm:$0xff]
    %v532 = vld [vmem:[%s505 + $0xd0] sm:$0xff]
    %v533 = vld [vmem:[%s505 + $0xd8] sm:$0xff]
    %v534 = vld [vmem:[%s505 + $0xe0] sm:$0xff]
    %v535 = vld [vmem:[%s505 + $0xe8] sm:$0xff]
    %v536 = vld [vmem:[%s505 + $0xf0] sm:$0xff]
    %v537 = vld [vmem:[%s505 + $0xf8] sm:$0xff]
    %v539 = vlaneseq
    %v540 = vshrl.u32 %v539, 7
    %v541 = vsub.s32 0, %v540
    %v542 = vrot.slane %v92, %v541
    %v543 = vlaneseq
    %v544 = vshrl.u32 %v543, 7
    %v545 = vsub.s32 1, %v544
    %v546 = vrot.slane %v92, %v545
    %v581 = vunpack.c.l.b16 %v506
    %v582 = vunpack.c.h.b16 %v506
    %v583 = vunpack.c.l.b16 %v507
    %v584 = vunpack.c.h.b16 %v507
    %v585 = vunpack.c.l.b16 %v508
    %v586 = vunpack.c.h.b16 %v508
    %v587 = vunpack.c.l.b16 %v509
    %v588 = vunpack.c.h.b16 %v509
    %v589 = vunpack.c.l.b16 %v510
    %v590 = vunpack.c.h.b16 %v510
    %v591 = vunpack.c.l.b16 %v511
    %v592 = vunpack.c.h.b16 %v511
    %v593 = vunpack.c.l.b16 %v512
    %v594 = vunpack.c.h.b16 %v512
    %v595 = vunpack.c.l.b16 %v513
    %v596 = vunpack.c.h.b16 %v513
    %v597 = vunpack.c.l.b16 %v514
    %v598 = vunpack.c.h.b16 %v514
    %v599 = vunpack.c.l.b16 %v515
    %v600 = vunpack.c.h.b16 %v515
    %v601 = vunpack.c.l.b16 %v516
    %v602 = vunpack.c.h.b16 %v516
    %v603 = vunpack.c.l.b16 %v517
    %v604 = vunpack.c.h.b16 %v517
    %v605 = vunpack.c.l.b16 %v518
    %v606 = vunpack.c.h.b16 %v518
    %v607 = vunpack.c.l.b16 %v519
    %v608 = vunpack.c.h.b16 %v519
    %v609 = vunpack.c.l.b16 %v520
    %v610 = vunpack.c.h.b16 %v520
    %v611 = vunpack.c.l.b16 %v521
    %v612 = vunpack.c.h.b16 %v521
    %v613 = vunpack.c.l.b16 %v522
    %v614 = vunpack.c.h.b16 %v522
    %v615 = vunpack.c.l.b16 %v523
    %v616 = vunpack.c.h.b16 %v523
    %v617 = vunpack.c.l.b16 %v524
    %v618 = vunpack.c.h.b16 %v524
    %v619 = vunpack.c.l.b16 %v525
    %v620 = vunpack.c.h.b16 %v525
    %v621 = vunpack.c.l.b16 %v526
    %v622 = vunpack.c.h.b16 %v526
    %v623 = vunpack.c.l.b16 %v527
    %v624 = vunpack.c.h.b16 %v527
    %v625 = vunpack.c.l.b16 %v528
    %v626 = vunpack.c.h.b16 %v528
    %v627 = vunpack.c.l.b16 %v529
    %v628 = vunpack.c.h.b16 %v529
    %v629 = vunpack.c.l.b16 %v530
    %v630 = vunpack.c.h.b16 %v530
    %v631 = vunpack.c.l.b16 %v531
    %v632 = vunpack.c.h.b16 %v531
    %v633 = vunpack.c.l.b16 %v532
    %v634 = vunpack.c.h.b16 %v532
    %v635 = vunpack.c.l.b16 %v533
    %v636 = vunpack.c.h.b16 %v533
    %v637 = vunpack.c.l.b16 %v534
    %v638 = vunpack.c.h.b16 %v534
    %v639 = vunpack.c.l.b16 %v535
    %v640 = vunpack.c.h.b16 %v535
    %v641 = vunpack.c.l.b16 %v536
    %v642 = vunpack.c.h.b16 %v536
    %v643 = vunpack.c.l.b16 %v537
    %v644 = vunpack.c.h.b16 %v537
    %v645 = vpack.c.b16 %v583, %v581
    %v646 = vpack.c.b16 %v584, %v582
    %v647 = vpack.c.b16 %v587, %v585
    %v648 = vpack.c.b16 %v588, %v586
    %v649 = vpack.c.b16 %v591, %v589
    %v650 = vpack.c.b16 %v592, %v590
    %v651 = vpack.c.b16 %v595, %v593
    %v652 = vpack.c.b16 %v596, %v594
    %v653 = vpack.c.b16 %v599, %v597
    %v654 = vpack.c.b16 %v600, %v598
    %v655 = vpack.c.b16 %v603, %v601
    %v656 = vpack.c.b16 %v604, %v602
    %v657 = vpack.c.b16 %v607, %v605
    %v658 = vpack.c.b16 %v608, %v606
    %v659 = vpack.c.b16 %v611, %v609
    %v660 = vpack.c.b16 %v612, %v610
    %v661 = vpack.c.b16 %v615, %v613
    %v662 = vpack.c.b16 %v616, %v614
    %v663 = vpack.c.b16 %v619, %v617
    %v664 = vpack.c.b16 %v620, %v618
    %v665 = vpack.c.b16 %v623, %v621
    %v666 = vpack.c.b16 %v624, %v622
    %v667 = vpack.c.b16 %v627, %v625
    %v668 = vpack.c.b16 %v628, %v626
    %v669 = vpack.c.b16 %v631, %v629
    %v670 = vpack.c.b16 %v632, %v630
    %v671 = vpack.c.b16 %v635, %v633
    %v672 = vpack.c.b16 %v636, %v634
    %v673 = vpack.c.b16 %v639, %v637
    %v674 = vpack.c.b16 %v640, %v638
    %v675 = vpack.c.b16 %v643, %v641
    %v676 = vpack.c.b16 %v644, %v642
    %709 = vmatprep.subr.bf16.mxu0 %v646
    %710 = vmatpush1.bf16.msra.mxu0 %v645
    %711 = vmatprep.subr.bf16.mxu0 %v648
    %712 = vmatpush1.bf16.msra.mxu0 %v647
    %713 = vmatprep.subr.bf16.mxu0 %v650
    %714 = vmatpush1.bf16.msra.mxu0 %v649
    %715 = vmatprep.subr.bf16.mxu0 %v652
    %716 = vmatpush1.bf16.msra.mxu0 %v651
    %717 = vmatprep.subr.bf16.mxu0 %v654
    %718 = vmatpush1.bf16.msra.mxu0 %v653
    %719 = vmatprep.subr.bf16.mxu0 %v656
    %720 = vmatpush1.bf16.msra.mxu0 %v655
    %721 = vmatprep.subr.bf16.mxu0 %v658
    %722 = vmatpush1.bf16.msra.mxu0 %v657
    %723 = vmatprep.subr.bf16.mxu0 %v660
    %724 = vmatpush1.bf16.msra.mxu0 %v659
    %725 = vmatprep.subr.bf16.mxu0 %v662
    %726 = vmatpush1.bf16.msra.mxu0 %v661
    %727 = vmatprep.subr.bf16.mxu0 %v664
    %728 = vmatpush1.bf16.msra.mxu0 %v663
    %729 = vmatprep.subr.bf16.mxu0 %v666
    %730 = vmatpush1.bf16.msra.mxu0 %v665
    %731 = vmatprep.subr.bf16.mxu0 %v668
    %732 = vmatpush1.bf16.msra.mxu0 %v667
    %733 = vmatprep.subr.bf16.mxu0 %v670
    %734 = vmatpush1.bf16.msra.mxu0 %v669
    %735 = vmatprep.subr.bf16.mxu0 %v672
    %736 = vmatpush1.bf16.msra.mxu0 %v671
    %737 = vmatprep.subr.bf16.mxu0 %v674
    %738 = vmatpush1.bf16.msra.mxu0 %v673
    %739 = vmatprep.subr.bf16.mxu0 %v676
    %740 = vmatpush1.bf16.msra.mxu0 %v675
    %741 = vmatprep.mubr.bf16.mxu0 %v256
    %742 = vmatmul.mubr.bf16.gmra.mrb[0].mxu0 %v255
    %v743 = vpop.f32.mrb[0].mxu0
    %v744 = vadd.f32 %v542, %v743
    %v745 = vpop.f32.mrb[0].mxu0
    %v746 = vadd.f32 %v546, %v745
    %v747 = vpop.f32.mrb[0].mxu0
    %v748 = vpop.f32.mrb[0].mxu0
    %749 = vdwg.mxu0
    %v750 = vmax.f32 %v744, 0.0
    %v751 = vmax.f32 %v746, 0.0
    %v752 = vpack.c.bf16 %v750, %v750
    %v753 = vpack.c.bf16 %v751, %v751
    %v754 = vld [vmem:[#allocation8] sm:$0xf]
    %v755 = vld [vmem:[#allocation8 + $0x4] sm:$0xf]
    %v756 = vld [vmem:[#allocation8 + $0x8] sm:$0xf]
    %v757 = vld [vmem:[#allocation8 + $0xc] sm:$0xf]
    %v758 = vld [vmem:[#allocation8 + $0x10] sm:$0xf]
    %v759 = vld [vmem:[#allocation8 + $0x14] sm:$0xf]
    %v760 = vld [vmem:[#allocation8 + $0x18] sm:$0xf]
    %v761 = vld [vmem:[#allocation8 + $0x1c] sm:$0xf]
    %v762 = vld [vmem:[#allocation8 + $0x20] sm:$0xf]
    %v763 = vld [vmem:[#allocation8 + $0x24] sm:$0xf]
    %v764 = vld [vmem:[#allocation8 + $0x28] sm:$0xf]
    %v765 = vld [vmem:[#allocation8 + $0x2c] sm:$0xf]
    %v766 = vld [vmem:[#allocation8 + $0x30] sm:$0xf]
    %v767 = vld [vmem:[#allocation8 + $0x34] sm:$0xf]
    %v768 = vld [vmem:[#allocation8 + $0x38] sm:$0xf]
    %v769 = vld [vmem:[#allocation8 + $0x3c] sm:$0xf]
    %v770 = vld [vmem:[#allocation8 + $0x40] sm:$0xf]
    %v771 = vld [vmem:[#allocation8 + $0x44] sm:$0xf]
    %v772 = vld [vmem:[#allocation8 + $0x48] sm:$0xf]
    %v773 = vld [vmem:[#allocation8 + $0x4c] sm:$0xf]
    %v774 = vld [vmem:[#allocation8 + $0x50] sm:$0xf]
    %v775 = vld [vmem:[#allocation8 + $0x54] sm:$0xf]
    %v776 = vld [vmem:[#allocation8 + $0x58] sm:$0xf]
    %v777 = vld [vmem:[#allocation8 + $0x5c] sm:$0xf]
    %v778 = vld [vmem:[#allocation8 + $0x60] sm:$0xf]
    %v779 = vld [vmem:[#allocation8 + $0x64] sm:$0xf]
    %v780 = vld [vmem:[#allocation8 + $0x68] sm:$0xf]
    %v781 = vld [vmem:[#allocation8 + $0x6c] sm:$0xf]
    %v782 = vld [vmem:[#allocation8 + $0x70] sm:$0xf]
    %v783 = vld [vmem:[#allocation8 + $0x74] sm:$0xf]
    %v784 = vld [vmem:[#allocation8 + $0x78] sm:$0xf]
    %v785 = vld [vmem:[#allocation8 + $0x7c] sm:$0xf]
    %v786 = vld [vmem:[#allocation8 + $0x80] sm:$0xf]
    %v787 = vld [vmem:[#allocation8 + $0x84] sm:$0xf]
    %v788 = vld [vmem:[#allocation8 + $0x88] sm:$0xf]
    %v789 = vld [vmem:[#allocation8 + $0x8c] sm:$0xf]
    %v790 = vld [vmem:[#allocation8 + $0x90] sm:$0xf]
    %v791 = vld [vmem:[#allocation8 + $0x94] sm:$0xf]
    %v792 = vld [vmem:[#allocation8 + $0x98] sm:$0xf]
    %v793 = vld [vmem:[#allocation8 + $0x9c] sm:$0xf]
    %v794 = vld [vmem:[#allocation8 + $0xa0] sm:$0xf]
    %v795 = vld [vmem:[#allocation8 + $0xa4] sm:$0xf]
    %v796 = vld [vmem:[#allocation8 + $0xa8] sm:$0xf]
    %v797 = vld [vmem:[#allocation8 + $0xac] sm:$0xf]
    %v798 = vld [vmem:[#allocation8 + $0xb0] sm:$0xf]
    %v799 = vld [vmem:[#allocation8 + $0xb4] sm:$0xf]
    %v800 = vld [vmem:[#allocation8 + $0xb8] sm:$0xf]
    %v801 = vld [vmem:[#allocation8 + $0xbc] sm:$0xf]
    %v802 = vld [vmem:[#allocation8 + $0xc0] sm:$0xf]
    %v803 = vld [vmem:[#allocation8 + $0xc4] sm:$0xf]
    %v804 = vld [vmem:[#allocation8 + $0xc8] sm:$0xf]
    %v805 = vld [vmem:[#allocation8 + $0xcc] sm:$0xf]
    %v806 = vld [vmem:[#allocation8 + $0xd0] sm:$0xf]
    %v807 = vld [vmem:[#allocation8 + $0xd4] sm:$0xf]
    %v808 = vld [vmem:[#allocation8 + $0xd8] sm:$0xf]
    %v809 = vld [vmem:[#allocation8 + $0xdc] sm:$0xf]
    %v810 = vld [vmem:[#allocation8 + $0xe0] sm:$0xf]
    %v811 = vld [vmem:[#allocation8 + $0xe4] sm:$0xf]
    %v812 = vld [vmem:[#allocation8 + $0xe8] sm:$0xf]
    %v813 = vld [vmem:[#allocation8 + $0xec] sm:$0xf]
    %v814 = vld [vmem:[#allocation8 + $0xf0] sm:$0xf]
    %v815 = vld [vmem:[#allocation8 + $0xf4] sm:$0xf]
    %v816 = vld [vmem:[#allocation8 + $0xf8] sm:$0xf]
    %v817 = vld [vmem:[#allocation8 + $0xfc] sm:$0xf]
    %v850 = vunpack.c.l.b16 %v786
    %v851 = vunpack.c.l.b16 %v787
    %v852 = vunpack.c.l.b16 %v788
    %v853 = vunpack.c.l.b16 %v789
    %v854 = vunpack.c.l.b16 %v790
    %v855 = vunpack.c.l.b16 %v791
    %v856 = vunpack.c.l.b16 %v792
    %v857 = vunpack.c.l.b16 %v793
    %v858 = vunpack.c.l.b16 %v794
    %v859 = vunpack.c.l.b16 %v795
    %v860 = vunpack.c.l.b16 %v796
    %v861 = vunpack.c.l.b16 %v797
    %v862 = vunpack.c.l.b16 %v798
    %v863 = vunpack.c.l.b16 %v799
    %v864 = vunpack.c.l.b16 %v800
    %v865 = vunpack.c.l.b16 %v801
    %v866 = vunpack.c.l.b16 %v802
    %v867 = vunpack.c.l.b16 %v803
    %v868 = vunpack.c.l.b16 %v804
    %v869 = vunpack.c.l.b16 %v805
    %v870 = vunpack.c.l.b16 %v806
    %v871 = vunpack.c.l.b16 %v807
    %v872 = vunpack.c.l.b16 %v808
    %v873 = vunpack.c.l.b16 %v809
    %v874 = vunpack.c.l.b16 %v810
    %v875 = vunpack.c.l.b16 %v811
    %v876 = vunpack.c.l.b16 %v812
    %v877 = vunpack.c.l.b16 %v813
    %v878 = vunpack.c.l.b16 %v814
    %v879 = vunpack.c.l.b16 %v815
    %v880 = vunpack.c.l.b16 %v816
    %v881 = vunpack.c.l.b16 %v817
    %v882 = vpack.c.b16 %v851, %v850
    %v883 = vpack.c.b16 %v853, %v852
    %v884 = vpack.c.b16 %v855, %v854
    %v885 = vpack.c.b16 %v857, %v856
    %v886 = vpack.c.b16 %v859, %v858
    %v887 = vpack.c.b16 %v861, %v860
    %v888 = vpack.c.b16 %v863, %v862
    %v889 = vpack.c.b16 %v865, %v864
    %v890 = vpack.c.b16 %v867, %v866
    %v891 = vpack.c.b16 %v869, %v868
    %v892 = vpack.c.b16 %v871, %v870
    %v893 = vpack.c.b16 %v873, %v872
    %v894 = vpack.c.b16 %v875, %v874
    %v895 = vpack.c.b16 %v877, %v876
    %v896 = vpack.c.b16 %v879, %v878
    %v897 = vpack.c.b16 %v881, %v880
    %914 = vmatprep.subr.bf16.mxu0 0
    %915 = vmatpush1.bf16.msra.mxu0 %v882
    %916 = vmatprep.subr.bf16.mxu0 0
    %917 = vmatpush1.bf16.msra.mxu0 %v883
    %918 = vmatprep.subr.bf16.mxu0 0
    %919 = vmatpush1.bf16.msra.mxu0 %v884
    %920 = vmatprep.subr.bf16.mxu0 0
    %921 = vmatpush1.bf16.msra.mxu0 %v885
    %922 = vmatprep.subr.bf16.mxu0 0
    %923 = vmatpush1.bf16.msra.mxu0 %v886
    %924 = vmatprep.subr.bf16.mxu0 0
    %925 = vmatpush1.bf16.msra.mxu0 %v887
    %926 = vmatprep.subr.bf16.mxu0 0
    %927 = vmatpush1.bf16.msra.mxu0 %v888
    %928 = vmatprep.subr.bf16.mxu0 0
    %929 = vmatpush1.bf16.msra.mxu0 %v889
    %930 = vmatprep.subr.bf16.mxu0 0
    %931 = vmatpush1.bf16.msra.mxu0 %v890
    %932 = vmatprep.subr.bf16.mxu0 0
    %933 = vmatpush1.bf16.msra.mxu0 %v891
    %934 = vmatprep.subr.bf16.mxu0 0
    %935 = vmatpush1.bf16.msra.mxu0 %v892
    %936 = vmatprep.subr.bf16.mxu0 0
    %937 = vmatpush1.bf16.msra.mxu0 %v893
    %938 = vmatprep.subr.bf16.mxu0 0
    %939 = vmatpush1.bf16.msra.mxu0 %v894
    %940 = vmatprep.subr.bf16.mxu0 0
    %941 = vmatpush1.bf16.msra.mxu0 %v895
    %942 = vmatprep.subr.bf16.mxu0 0
    %943 = vmatpush1.bf16.msra.mxu0 %v896
    %944 = vmatprep.subr.bf16.mxu0 0
    %945 = vmatpush1.bf16.msra.mxu0 %v897
    %946 = vmatprep.mubr.bf16.mxu0 %v753
    %947 = vmatmul.mubr.bf16.gmra.mrb[0].mxu0 %v752
    %v948 = vpop.f32.mrb[0].mxu0
    %v949 = vadd.f32 0.0, %v948
    %v950 = vpop.f32.mrb[0].mxu0
    %v951 = vpop.f32.mrb[0].mxu0
    %v952 = vpop.f32.mrb[0].mxu0
    %953 = vdwg.mxu0
    %v986 = vunpack.c.l.b16 %v754
    %v987 = vunpack.c.l.b16 %v755
    %v988 = vunpack.c.l.b16 %v756
    %v989 = vunpack.c.l.b16 %v757
    %v990 = vunpack.c.l.b16 %v758
    %v991 = vunpack.c.l.b16 %v759
    %v992 = vunpack.c.l.b16 %v760
    %v993 = vunpack.c.l.b16 %v761
    %v994 = vunpack.c.l.b16 %v762
    %v995 = vunpack.c.l.b16 %v763
    %v996 = vunpack.c.l.b16 %v764
    %v997 = vunpack.c.l.b16 %v765
    %v998 = vunpack.c.l.b16 %v766
    %v999 = vunpack.c.l.b16 %v767
    %v1000 = vunpack.c.l.b16 %v768
    %v1001 = vunpack.c.l.b16 %v769
    %v1002 = vunpack.c.l.b16 %v770
    %v1003 = vunpack.c.l.b16 %v771
    %v1004 = vunpack.c.l.b16 %v772
    %v1005 = vunpack.c.l.b16 %v773
    %v1006 = vunpack.c.l.b16 %v774
    %v1007 = vunpack.c.l.b16 %v775
    %v1008 = vunpack.c.l.b16 %v776
    %v1009 = vunpack.c.l.b16 %v777
    %v1010 = vunpack.c.l.b16 %v778
    %v1011 = vunpack.c.l.b16 %v779
    %v1012 = vunpack.c.l.b16 %v780
    %v1013 = vunpack.c.l.b16 %v781
    %v1014 = vunpack.c.l.b16 %v782
    %v1015 = vunpack.c.l.b16 %v783
    %v1016 = vunpack.c.l.b16 %v784
    %v1017 = vunpack.c.l.b16 %v785
    %v1018 = vpack.c.b16 %v987, %v986
    %v1019 = vpack.c.b16 %v989, %v988
    %v1020 = vpack.c.b16 %v991, %v990
    %v1021 = vpack.c.b16 %v993, %v992
    %v1022 = vpack.c.b16 %v995, %v994
    %v1023 = vpack.c.b16 %v997, %v996
    %v1024 = vpack.c.b16 %v999, %v998
    %v1025 = vpack.c.b16 %v1001, %v1000
    %v1026 = vpack.c.b16 %v1003, %v1002
    %v1027 = vpack.c.b16 %v1005, %v1004
    %v1028 = vpack.c.b16 %v1007, %v1006
    %v1029 = vpack.c.b16 %v1009, %v1008
    %v1030 = vpack.c.b16 %v1011, %v1010
    %v1031 = vpack.c.b16 %v1013, %v1012
    %v1032 = vpack.c.b16 %v1015, %v1014
    %v1033 = vpack.c.b16 %v1017, %v1016
    %1050 = vmatprep.subr.bf16.mxu0 0
    %1051 = vmatpush1.bf16.msra.mxu0 %v1018
    %1052 = vmatprep.subr.bf16.mxu0 0
    %1053 = vmatpush1.bf16.msra.mxu0 %v1019
    %1054 = vmatprep.subr.bf16.mxu0 0
    %1055 = vmatpush1.bf16.msra.mxu0 %v1020
    %1056 = vmatprep.subr.bf16.mxu0 0
    %1057 = vmatpush1.bf16.msra.mxu0 %v1021
    %1058 = vmatprep.subr.bf16.mxu0 0
    %1059 = vmatpush1.bf16.msra.mxu0 %v1022
    %1060 = vmatprep.subr.bf16.mxu0 0
    %1061 = vmatpush1.bf16.msra.mxu0 %v1023
    %1062 = vmatprep.subr.bf16.mxu0 0
    %1063 = vmatpush1.bf16.msra.mxu0 %v1024
    %1064 = vmatprep.subr.bf16.mxu0 0
    %1065 = vmatpush1.bf16.msra.mxu0 %v1025
    %1066 = vmatprep.subr.bf16.mxu0 0
    %1067 = vmatpush1.bf16.msra.mxu0 %v1026
    %1068 = vmatprep.subr.bf16.mxu0 0
    %1069 = vmatpush1.bf16.msra.mxu0 %v1027
    %1070 = vmatprep.subr.bf16.mxu0 0
    %1071 = vmatpush1.bf16.msra.mxu0 %v1028
    %1072 = vmatprep.subr.bf16.mxu0 0
    %1073 = vmatpush1.bf16.msra.mxu0 %v1029
    %1074 = vmatprep.subr.bf16.mxu0 0
    %1075 = vmatpush1.bf16.msra.mxu0 %v1030
    %1076 = vmatprep.subr.bf16.mxu0 0
    %1077 = vmatpush1.bf16.msra.mxu0 %v1031
    %1078 = vmatprep.subr.bf16.mxu0 0
    %1079 = vmatpush1.bf16.msra.mxu0 %v1032
    %1080 = vmatprep.subr.bf16.mxu0 0
    %1081 = vmatpush1.bf16.msra.mxu0 %v1033
    %1082 = vmatprep.mubr.bf16.mxu0 %v504
    %1083 = vmatmul.mubr.bf16.gmra.mrb[0].mxu0 %v503
    %v1084 = vpop.f32.mrb[0].mxu0
    %v1085 = vadd.f32 %v949, %v1084
    %v1086 = vpop.f32.mrb[0].mxu0
    %v1087 = vpop.f32.mrb[0].mxu0
    %v1088 = vpop.f32.mrb[0].mxu0
    %1089 = vdwg.mxu0
    %v1090 = vlaneseq
    %v1091 = vshrl.u32 %v1090, 7
    %v1092 = vsub.s32 0, %v1091
    %v1093 = vrot.slane %v93, %v1092
    %v1094 = vadd.f32 %v1085, %v1093
    %v1095 = vlaneseq
    %v1096 = vand.u32 %v1095, 127
    %vm1097 = vcmp.lt.s32.totalorder %v1096, 8
    %v1098 = vsel %vm1097, %v1094, -inf
    %1099 = vmax.xlane.f32.xlu0 %v1098
    %v1100 = vpop.xlane.xlu0 %1099
    %v1101 = vsub.f32 %v1098, %v1100
    %v1102 = vmul.f32 %v1101, 1.442695
    %v1103 = vpow.pop %v1102
    %1104 = vadd.xlane.f32.xlu0 %v1103
    %v1105 = vpop.xlane.xlu0 %1104
    %v1106 = vrcp.pop %v1105
    %v1107 = vmul.f32 %v1103, %v1106
    %v1108 = vsub.f32 %v1094, %v1100
    %v1109 = vlog2.pop %v1105
    %v1110 = vmul.f32 %v1109, 0.6931472
    %v1111 = vsub.f32 %v1108, %v1110
    %vm1112 = vcmp.lt.s32.totalorder %v1096, 16
    %vm1113 = vcmp.eq.s32.totalorder %v1096, 16
    %v1114 = vsel %vm1113, %v1094, 0.0
    %v1115 = vsel %vm1112, %v1111, %v1114
    %v1116 = vsel %vm1097, %v1107, %v1115
    %1117 = vst [vmem:[#allocation11] sm:$0xff] %v1116
    // Predicated region
    $region42: #{tpu_custom_call.1} parent=1 // pred_check
      _
    $region43: #{tpu_custom_call.1} parent=1 // pred_check_branch
      %1119 = sbr.rel (0) target = $region45
    $region44: #{tpu_custom_call.1} parent=1 // pred_region
      %s1121 = ssub.s32 128, 128
      %1122 = vsyncadd [#allocation4], %s1121
      %s1124 = sshll.u32 [#allocation11], 4
      %s1125 = int_to_ptr.vmem [resolvable:$true] %s1124
      %1127 = dma.vmem_to_hbm [thread:$0]  %s1125, 128, %s5, [#allocation4]
    $region45: #{tpu_custom_call.1} parent=1 // pred_fallthru
      _
    // Predicated region
    $region46: #{tpu_custom_call.1} parent=1 // pred_check
      _
    $region47: #{tpu_custom_call.1} parent=1 // pred_check_branch
      %1129 = sbr.rel (0) target = $region49
    $region48: #{tpu_custom_call.1} parent=1 // pred_region
      %1130 = dma.done [#allocation4], 128
    $region49: #{tpu_custom_call.1} parent=1 // pred_fallthru
      _
    %1131 = vsyncpa [#allocation3], 1
    %1132 = vsyncpa [#allocation6], 1
    %1133 = vsyncpa [#allocation9], 1
    %1134 = vsyncpa [#allocation4], 1

</llo_original>
